<compile_context>
chip_gen: v6e
topology: v6e:2x2x1
jax: 0.10.0
libtpu: 0.0.40
codegen_flags: <defaults>
</compile_context>

<pallas_src>
import jax
import jax.numpy as jnp
from jax.experimental import pallas as pl
from jax.experimental.pallas import tpu as pltpu


def _round_up(a, m):
    return (a + m - 1) // m * m


def _classifier_kernel(x_ref, w_ref, b_ref, o_ref):
    # x_ref: (TN, V*H)   w_ref: (V*H, nc)   b_ref: (1, nc)   o_ref: (TN, nc)
    acc = jnp.dot(x_ref[...], w_ref[...], preferred_element_type=jnp.float32)
    o_ref[...] = (acc + b_ref[...]).astype(o_ref.dtype)


def _pick_tile_n(N, block_n):
    """Pick the batch-tile size: <= block_n, 8-aligned (or == N), aiming for an
    even number of grid steps so both v7x TensorCores get work."""
    block_n = max(8, (block_n // 8) * 8)
    if N <= 16 or (N <= block_n // 2 and N <= 1024):
        return N                       # tiny batch: one full-dim tile (always legal)
    tiles = max(2, pl.cdiv(N, block_n))
    if tiles % 2:
        tiles += 1                     # even tile count -> balanced megacore split
    tn = min(block_n, _round_up(pl.cdiv(N, tiles), 8))
    return min(tn, N)


def classifier_layer(x, conv_weight, conv_bias, *, block_n=2048, x_buffers=2):
    """x: (N, V, H); conv_weight: (nc, H, 1, 1); conv_bias: (nc,) -> (N, nc)."""
    N, V, H = x.shape
    nc = conv_weight.shape[0]
    K = V * H

    # ---- wrapper-side glue (plain JAX, no extra HBM pass over x) ----
    # Fold avg_pool's 1/V and the 1x1 conv into a single (V*H, nc) matmul weight:
    #   Wf[v*H + h, c] = W[c, h] / V
    w_hc = jnp.transpose(conv_weight.reshape(nc, H), (1, 0)) * (1.0 / V)   # (H, nc)
    w = jnp.tile(w_hc, (V, 1)).astype(x.dtype)                             # (V*H, nc)
    b = conv_bias.reshape(1, nc).astype(jnp.float32)                       # (1, nc)
    x2 = x.reshape(N, K)                                                   # free (contiguous)

    tn = _pick_tile_n(N, block_n)
    grid_n = pl.cdiv(N, tn)            # ragged last tile handled by Pallas masked writeback

    itemsize = jnp.dtype(x.dtype).itemsize
    # VMEM footprint: double-buffered x tile + double-buffered out tile (lane-padded)
    # + resident weight/bias, with headroom.  Keep under the 64 MiB v7x physical VMEM.
    nbuf = max(2, x_buffers)
    vmem_bytes = (nbuf * tn * K * itemsize
                  + 2 * tn * _round_up(nc, 128) * 4
                  + K * _round_up(nc, 128) * itemsize
                  + (8 << 20))
    vmem_limit = int(min(max(vmem_bytes, 32 << 20), 48 << 20))

    cost = pl.CostEstimate(
        flops=2 * N * K * nc,
        transcendentals=0,
        bytes_accessed=N * K * itemsize          # stream x
        + K * nc * itemsize                      # resident weight
        + N * nc * 4,                            # narrow output writeback
    )

    x_spec_kwargs = {}
    if x_buffers > 2 and grid_n >= x_buffers:
        # Optional deeper pipeline on the streamed input (useful on v7x where
        # per-step DMA is sub-microsecond).
        x_spec_kwargs["pipeline_mode"] = pl.Buffered(x_buffers)

    out = pl.pallas_call(
        _classifier_kernel,
        out_shape=jax.ShapeDtypeStruct((N, nc), x.dtype),
        grid_spec=pltpu.PrefetchScalarGridSpec(
            num_scalar_prefetch=0,
            grid=(grid_n,),
            in_specs=[
                pl.BlockSpec((tn, K), lambda i: (i, 0), **x_spec_kwargs),  # streamed x
                pl.BlockSpec((K, nc), lambda i: (0, 0)),                   # resident weight
                pl.BlockSpec((1, nc), lambda i: (0, 0)),                   # resident bias
            ],
            out_specs=pl.BlockSpec((tn, nc), lambda i: (i, 0)),
        ),
        compiler_params=pltpu.CompilerParams(
            dimension_semantics=("parallel",),   # independent N-tiles -> megacore
            vmem_limit_bytes=vmem_limit,
        ),
        cost_estimate=cost,
    )(x2, w, b)

    return out


def _reference(x, conv_weight, conv_bias):
    # Pure-JAX reference mirroring the PyTorch forward.
    N, V, H = x.shape
    nc = conv_weight.shape[0]
    pooled = jnp.mean(jnp.transpose(x, (0, 2, 1)), axis=2)             # (N, H)
    w = conv_weight.reshape(nc, H)                                     # (nc, H)
    return pooled @ w.T + conv_bias[None, :]                           # (N, nc)


if __name__ == "__main__":
    key = jax.random.PRNGKey(0)
    k_x, k_w, k_b, k_x2 = jax.random.split(key, 4)

    # Small shapes consistent with the module.
    N, V, H, nc = 2, 16, 32, 5

    x = jax.random.normal(k_x, (N, V, H), dtype=jnp.float32)
    # Deterministic "Conv2d(H, nc, kernel_size=1)" parameters.
    conv_weight = jax.random.normal(k_w, (nc, H, 1, 1), dtype=jnp.float32) * 0.1
    conv_bias = jax.random.normal(k_b, (nc,), dtype=jnp.float32) * 0.1

    out = classifier_layer(x, conv_weight, conv_bias)
    out = jax.block_until_ready(out)
    ref = _reference(x, conv_weight, conv_bias)
    assert out.shape == (N, nc)
    assert jnp.allclose(out, ref, atol=1e-5, rtol=1e-5), "mismatch vs reference (small)"

    # Multi-tile path: N larger than the tiny-tile threshold, ragged last tile,
    # no wrapper-side padding of x.
    N2 = 1100
    x2 = jax.random.normal(k_x2, (N2, V, H), dtype=jnp.float32)
    out2 = classifier_layer(x2, conv_weight, conv_bias, block_n=512)
    out2 = jax.block_until_ready(out2)
    ref2 = _reference(x2, conv_weight, conv_bias)
    assert out2.shape == (N2, nc)
    assert jnp.allclose(out2, ref2, atol=1e-4, rtol=1e-5), "mismatch vs reference (tiled)"

    print("KERNEL_OK")
</pallas_src>

<mosaic_0001>
module attributes {stable_mosaic.version = 11 : i64} {
  func.func @_classifier_kernel(%arg0: i32, %arg1: memref<2x512xf32, #tpu.memory_space<vmem>>, %arg2: memref<512x5xf32, #tpu.memory_space<vmem>>, %arg3: memref<1x5xf32, #tpu.memory_space<vmem>>, %arg4: memref<2x5xf32, #tpu.memory_space<vmem>>) attributes {dimension_semantics = [#tpu.dimension_semantics<parallel>], iteration_bounds = array<i64: 1>, scalar_prefetch = 0 : i64, scratch_operands = 0 : i64, tpu.core_type = #tpu.core_type<tc>, window_params = [{transform_indices = @transform_0, window_bounds = array<i64: 2, 512>}, {pipeline_mode = #tpu.pipeline_mode<synchronous>, transform_indices = @transform_1, window_bounds = array<i64: 512, 5>}, {pipeline_mode = #tpu.pipeline_mode<synchronous>, transform_indices = @transform_2, window_bounds = array<i64: 1, 5>}, {transform_indices = @transform_3, window_bounds = array<i64: 2, 5>}]} {
    %c0 = arith.constant 0 : index
    %c0_0 = arith.constant 0 : index
    %0 = vector.load %arg1[%c0, %c0_0] : memref<2x512xf32, #tpu.memory_space<vmem>>, vector<2x512xf32>
    %c0_1 = arith.constant 0 : index
    %c0_2 = arith.constant 0 : index
    %1 = vector.load %arg2[%c0_1, %c0_2] : memref<512x5xf32, #tpu.memory_space<vmem>>, vector<512x5xf32>
    %cst = arith.constant dense<0.000000e+00> : vector<2x5xf32>
    %2 = tpu.matmul %0, %1, %cst {dimension_numbers = #tpu.dot_dimension_numbers<[1], [0], [0], [1], [0, 0, 1, 1], [], []>} : vector<2x512xf32>, vector<512x5xf32>, vector<2x5xf32> -> vector<2x5xf32>
    %c0_3 = arith.constant 0 : index
    %c0_4 = arith.constant 0 : index
    %3 = vector.load %arg3[%c0_3, %c0_4] : memref<1x5xf32, #tpu.memory_space<vmem>>, vector<1x5xf32>
    %4 = vector.broadcast %3 : vector<1x5xf32> to vector<2x5xf32>
    %5 = arith.addf %2, %4 : vector<2x5xf32>
    %c0_5 = arith.constant 0 : index
    %c0_6 = arith.constant 0 : index
    %6 = vector.load %arg4[%c0_5, %c0_6] : memref<2x5xf32, #tpu.memory_space<vmem>>, vector<2x5xf32>
    tpu.vector_store %arg4[%c0_5, %c0_6], %5 {strides = array<i32>} : memref<2x5xf32, #tpu.memory_space<vmem>>, vector<2x5xf32>,
    return
  }
  func.func @transform_0(%arg0: i32) -> (i32, i32) {
    %c0_i32 = arith.constant 0 : i32
    %c0_i32_0 = arith.constant 0 : i32
    return %arg0, %c0_i32 : i32, i32
  }
  func.func @transform_1(%arg0: i32) -> (i32, i32) {
    %c0_i32 = arith.constant 0 : i32
    %c0_i32_0 = arith.constant 0 : i32
    %c0_i32_1 = arith.constant 0 : i32
    return %c0_i32, %c0_i32_0 : i32, i32
  }
  func.func @transform_2(%arg0: i32) -> (i32, i32) {
    %c0_i32 = arith.constant 0 : i32
    %c0_i32_0 = arith.constant 0 : i32
    %c0_i32_1 = arith.constant 0 : i32
    return %c0_i32, %c0_i32_0 : i32, i32
  }
  func.func @transform_3(%arg0: i32) -> (i32, i32) {
    %c0_i32 = arith.constant 0 : i32
    %c0_i32_0 = arith.constant 0 : i32
    return %arg0, %c0_i32 : i32, i32
  }
}

</mosaic_0001>

<llo_original>
// kernel: tpu_custom_call.1
$region0: #{tpu_custom_call.1}
  #allocation0 [shape = 'u32[]', space=smem, size = 0x4, offset = 0x4, fixed_abs, tag = 'smem constant byte address 0x4 - core index']
  #allocation1 [shape = 'u32[144,128]{1,0:T(1,128)}', space=vmem, size = 0x12000, scoped, tag = 'internal scratch']
  %s0 = inlined_call_operand.vmem [shape: f32[2,512], index: 0, kind: input, shape index: {}]
  %s1 = inlined_call_operand.vmem [shape: f32[512,5], index: 1, kind: input, shape index: {}]
  %s2 = inlined_call_operand.vmem [shape: f32[1,5], index: 2, kind: input, shape index: {}]
  %s3 = inlined_call_operand.hbm [shape: f32[2,5], index: 3, kind: output, shape index: {}]
  %s4 = sld [smem:[#allocation0]]
  $region22: #{tpu_custom_call.1} parent=0
    _
  %s6 = ssub.s32 1, %s4
  %s7 = scalar_select 0, %s6, %s4
  $region1: #{tpu_custom_call.1} parent=0
    #allocation2 [shape = 'u8[1024]{0}', space=vmem, size = 0x400, scoped, tag = 'output window, operand 0, single buffered']
    #allocation3 [shape = 's32[1]{0}', space=sflag, size = 0x4, scoped, tag = 'scoped memory for tpu_custom_call.1']
    %8 = vsyncpa [#allocation3], 0
    // Predicated region
    $region2: #{tpu_custom_call.1} parent=1 // pred_check
      _
    $region3: #{tpu_custom_call.1} parent=1 // pred_check_branch
      %10 = sbr.rel (0) target = $region5
    $region4: #{tpu_custom_call.1} parent=1 // pred_region
      _
    $region5: #{tpu_custom_call.1} parent=1 // pred_fallthru
      _
    // Predicated region
    $region6: #{tpu_custom_call.1} parent=1 // pred_check
      _
    $region7: #{tpu_custom_call.1} parent=1 // pred_check_branch
      %12 = sbr.rel (0) target = $region9
    $region8: #{tpu_custom_call.1} parent=1 // pred_region
      _
    $region9: #{tpu_custom_call.1} parent=1 // pred_fallthru
      _
    // Predicated region
    $region10: #{tpu_custom_call.1} parent=1 // pred_check
      _
    $region11: #{tpu_custom_call.1} parent=1 // pred_check_branch
      %14 = sbr.rel (0) target = $region13
    $region12: #{tpu_custom_call.1} parent=1 // pred_region
      _
    $region13: #{tpu_custom_call.1} parent=1 // pred_fallthru
      _
    %v15 = vld [vmem:[%s0] sm:$0xff]
    %v16 = vld [vmem:[%s1] sm:$0xff]
    %v17 = vld [vmem:[%s1 + $0x8] sm:$0xff]
    %v18 = vld [vmem:[%s1 + $0x10] sm:$0xff]
    %v19 = vld [vmem:[%s1 + $0x18] sm:$0xff]
    %v20 = vld [vmem:[%s1 + $0x20] sm:$0xff]
    %v21 = vld [vmem:[%s1 + $0x28] sm:$0xff]
    %v22 = vld [vmem:[%s1 + $0x30] sm:$0xff]
    %v23 = vld [vmem:[%s1 + $0x38] sm:$0xff]
    %v24 = vld [vmem:[%s1 + $0x40] sm:$0xff]
    %v25 = vld [vmem:[%s1 + $0x48] sm:$0xff]
    %v26 = vld [vmem:[%s1 + $0x50] sm:$0xff]
    %v27 = vld [vmem:[%s1 + $0x58] sm:$0xff]
    %v28 = vld [vmem:[%s1 + $0x60] sm:$0xff]
    %v29 = vld [vmem:[%s1 + $0x68] sm:$0xff]
    %v30 = vld [vmem:[%s1 + $0x70] sm:$0xff]
    %v31 = vld [vmem:[%s1 + $0x78] sm:$0xff]
    %v32 = vld [vmem:[%s1 + $0x80] sm:$0xff]
    %v33 = vld [vmem:[%s1 + $0x88] sm:$0xff]
    %v34 = vld [vmem:[%s1 + $0x90] sm:$0xff]
    %v35 = vld [vmem:[%s1 + $0x98] sm:$0xff]
    %v36 = vld [vmem:[%s1 + $0xa0] sm:$0xff]
    %v37 = vld [vmem:[%s1 + $0xa8] sm:$0xff]
    %v38 = vld [vmem:[%s1 + $0xb0] sm:$0xff]
    %v39 = vld [vmem:[%s1 + $0xb8] sm:$0xff]
    %v40 = vld [vmem:[%s1 + $0xc0] sm:$0xff]
    %v41 = vld [vmem:[%s1 + $0xc8] sm:$0xff]
    %v42 = vld [vmem:[%s1 + $0xd0] sm:$0xff]
    %v43 = vld [vmem:[%s1 + $0xd8] sm:$0xff]
    %v44 = vld [vmem:[%s1 + $0xe0] sm:$0xff]
    %v45 = vld [vmem:[%s1 + $0xe8] sm:$0xff]
    %v46 = vld [vmem:[%s1 + $0xf0] sm:$0xff]
    %v47 = vld [vmem:[%s1 + $0xf8] sm:$0xff]
    %v48 = vld [vmem:[%s1 + $0x100] sm:$0xff]
    %v49 = vld [vmem:[%s1 + $0x108] sm:$0xff]
    %v50 = vld [vmem:[%s1 + $0x110] sm:$0xff]
    %v51 = vld [vmem:[%s1 + $0x118] sm:$0xff]
    %v52 = vld [vmem:[%s1 + $0x120] sm:$0xff]
    %v53 = vld [vmem:[%s1 + $0x128] sm:$0xff]
    %v54 = vld [vmem:[%s1 + $0x130] sm:$0xff]
    %v55 = vld [vmem:[%s1 + $0x138] sm:$0xff]
    %v56 = vld [vmem:[%s1 + $0x140] sm:$0xff]
    %v57 = vld [vmem:[%s1 + $0x148] sm:$0xff]
    %v58 = vld [vmem:[%s1 + $0x150] sm:$0xff]
    %v59 = vld [vmem:[%s1 + $0x158] sm:$0xff]
    %v60 = vld [vmem:[%s1 + $0x160] sm:$0xff]
    %v61 = vld [vmem:[%s1 + $0x168] sm:$0xff]
    %v62 = vld [vmem:[%s1 + $0x170] sm:$0xff]
    %v63 = vld [vmem:[%s1 + $0x178] sm:$0xff]
    %v64 = vld [vmem:[%s1 + $0x180] sm:$0xff]
    %v65 = vld [vmem:[%s1 + $0x188] sm:$0xff]
    %v66 = vld [vmem:[%s1 + $0x190] sm:$0xff]
    %v67 = vld [vmem:[%s1 + $0x198] sm:$0xff]
    %v68 = vld [vmem:[%s1 + $0x1a0] sm:$0xff]
    %v69 = vld [vmem:[%s1 + $0x1a8] sm:$0xff]
    %v70 = vld [vmem:[%s1 + $0x1b0] sm:$0xff]
    %v71 = vld [vmem:[%s1 + $0x1b8] sm:$0xff]
    %v72 = vld [vmem:[%s1 + $0x1c0] sm:$0xff]
    %v73 = vld [vmem:[%s1 + $0x1c8] sm:$0xff]
    %v74 = vld [vmem:[%s1 + $0x1d0] sm:$0xff]
    %v75 = vld [vmem:[%s1 + $0x1d8] sm:$0xff]
    %v76 = vld [vmem:[%s1 + $0x1e0] sm:$0xff]
    %v77 = vld [vmem:[%s1 + $0x1e8] sm:$0xff]
    %v78 = vld [vmem:[%s1 + $0x1f0] sm:$0xff]
    %v79 = vld [vmem:[%s1 + $0x1f8] sm:$0xff]
    %v80 = vld [vmem:[%s2] sm:$0x1]
    %v82 = vlaneseq
    %v83 = vshrl.u32 %v82, 7
    %v84 = vsub.s32 0, %v83
    %v85 = vrot.slane %v80, %v84
    %v88 = vcombine.high %v15, %v15
    %v90 = vunpack.c.l.s4 1983009808
    %v91 = vunpack.c.0.s8 %v90
    %v92 = vlaneseq
    %v93 = vshrl.u32 %v92, 7
    %v94 = vsub.s32 %v91, %v93
    %v95 = vrot.slane %v15, %v94
    %v97 = vunpack.c.l.s4 1983009808
    %v98 = vunpack.c.0.s8 %v97
    %v99 = vlaneseq
    %v100 = vshrl.u32 %v99, 7
    %v101 = vsub.s32 %v98, %v100
    %v102 = vrot.slane %v88, %v101
    %v103 = vcombine.high %v95, %v95
    %v104 = vcombine.high %v102, %v102
    %109 = vmatprep.subr.mxu0 0.0
    %110 = vmatpush1.msra.mxu0 %v31
    %111 = vmatprep.subr.mxu0 0.0
    %112 = vmatpush1.msra.mxu0 %v30
    %113 = vmatprep.subr.mxu0 0.0
    %114 = vmatpush1.msra.mxu0 %v29
    %115 = vmatprep.subr.mxu0 0.0
    %116 = vmatpush1.msra.mxu0 %v28
    %117 = vmatprep.subr.mxu0 0.0
    %118 = vmatpush1.msra.mxu0 %v27
    %119 = vmatprep.subr.mxu0 0.0
    %120 = vmatpush1.msra.mxu0 %v26
    %121 = vmatprep.subr.mxu0 0.0
    %122 = vmatpush1.msra.mxu0 %v25
    %123 = vmatprep.subr.mxu0 0.0
    %124 = vmatpush1.msra.mxu0 %v24
    %125 = vmatprep.subr.mxu0 0.0
    %126 = vmatpush1.msra.mxu0 %v23
    %127 = vmatprep.subr.mxu0 0.0
    %128 = vmatpush1.msra.mxu0 %v22
    %129 = vmatprep.subr.mxu0 0.0
    %130 = vmatpush1.msra.mxu0 %v21
    %131 = vmatprep.subr.mxu0 0.0
    %132 = vmatpush1.msra.mxu0 %v20
    %133 = vmatprep.subr.mxu0 0.0
    %134 = vmatpush1.msra.mxu0 %v19
    %135 = vmatprep.subr.mxu0 0.0
    %136 = vmatpush1.msra.mxu0 %v18
    %137 = vmatprep.subr.mxu0 0.0
    %138 = vmatpush1.msra.mxu0 %v17
    %139 = vmatprep.subr.mxu0 0.0
    %140 = vmatpush1.msra.mxu0 %v16
    %141 = vmatprep.subr.mxu0 0.0
    %142 = vmatpush2.msra.mxu0 %v47
    %143 = vmatprep.subr.mxu0 0.0
    %144 = vmatpush2.msra.mxu0 %v46
    %145 = vmatprep.subr.mxu0 0.0
    %146 = vmatpush2.msra.mxu0 %v45
    %147 = vmatprep.subr.mxu0 0.0
    %148 = vmatpush2.msra.mxu0 %v44
    %149 = vmatprep.subr.mxu0 0.0
    %150 = vmatpush2.msra.mxu0 %v43
    %151 = vmatprep.subr.mxu0 0.0
    %152 = vmatpush2.msra.mxu0 %v42
    %153 = vmatprep.subr.mxu0 0.0
    %154 = vmatpush2.msra.mxu0 %v41
    %155 = vmatprep.subr.mxu0 0.0
    %156 = vmatpush2.msra.mxu0 %v40
    %157 = vmatprep.subr.mxu0 0.0
    %158 = vmatpush2.msra.mxu0 %v39
    %159 = vmatprep.subr.mxu0 0.0
    %160 = vmatpush2.msra.mxu0 %v38
    %161 = vmatprep.subr.mxu0 0.0
    %162 = vmatpush2.msra.mxu0 %v37
    %163 = vmatprep.subr.mxu0 0.0
    %164 = vmatpush2.msra.mxu0 %v36
    %165 = vmatprep.subr.mxu0 0.0
    %166 = vmatpush2.msra.mxu0 %v35
    %167 = vmatprep.subr.mxu0 0.0
    %168 = vmatpush2.msra.mxu0 %v34
    %169 = vmatprep.subr.mxu0 0.0
    %170 = vmatpush2.msra.mxu0 %v33
    %171 = vmatprep.subr.mxu0 0.0
    %172 = vmatpush2.msra.mxu0 %v32
    %173 = vmatprep.mubr.f32.mxu0 %v103
    %174 = vmatmul.mubr.f32.gmra.mxu0 %v95
    %v175 = vpop.f32.mrf.mxu0
    %v176 = vadd.f32 %v85, %v175
    %v177 = vpop.f32.mrf.mxu0
    %178 = vdwg.mxu0
    %179 = vmatprep.subr.mxu0 0.0
    %180 = vmatpush1.msra.mxu0 %v63
    %181 = vmatprep.subr.mxu0 0.0
    %182 = vmatpush1.msra.mxu0 %v62
    %183 = vmatprep.subr.mxu0 0.0
    %184 = vmatpush1.msra.mxu0 %v61
    %185 = vmatprep.subr.mxu0 0.0
    %186 = vmatpush1.msra.mxu0 %v60
    %187 = vmatprep.subr.mxu0 0.0
    %188 = vmatpush1.msra.mxu0 %v59
    %189 = vmatprep.subr.mxu0 0.0
    %190 = vmatpush1.msra.mxu0 %v58
    %191 = vmatprep.subr.mxu0 0.0
    %192 = vmatpush1.msra.mxu0 %v57
    %193 = vmatprep.subr.mxu0 0.0
    %194 = vmatpush1.msra.mxu0 %v56
    %195 = vmatprep.subr.mxu0 0.0
    %196 = vmatpush1.msra.mxu0 %v55
    %197 = vmatprep.subr.mxu0 0.0
    %198 = vmatpush1.msra.mxu0 %v54
    %199 = vmatprep.subr.mxu0 0.0
    %200 = vmatpush1.msra.mxu0 %v53
    %201 = vmatprep.subr.mxu0 0.0
    %202 = vmatpush1.msra.mxu0 %v52
    %203 = vmatprep.subr.mxu0 0.0
    %204 = vmatpush1.msra.mxu0 %v51
    %205 = vmatprep.subr.mxu0 0.0
    %206 = vmatpush1.msra.mxu0 %v50
    %207 = vmatprep.subr.mxu0 0.0
    %208 = vmatpush1.msra.mxu0 %v49
    %209 = vmatprep.subr.mxu0 0.0
    %210 = vmatpush1.msra.mxu0 %v48
    %211 = vmatprep.subr.mxu0 0.0
    %212 = vmatpush2.msra.mxu0 %v79
    %213 = vmatprep.subr.mxu0 0.0
    %214 = vmatpush2.msra.mxu0 %v78
    %215 = vmatprep.subr.mxu0 0.0
    %216 = vmatpush2.msra.mxu0 %v77
    %217 = vmatprep.subr.mxu0 0.0
    %218 = vmatpush2.msra.mxu0 %v76
    %219 = vmatprep.subr.mxu0 0.0
    %220 = vmatpush2.msra.mxu0 %v75
    %221 = vmatprep.subr.mxu0 0.0
    %222 = vmatpush2.msra.mxu0 %v74
    %223 = vmatprep.subr.mxu0 0.0
    %224 = vmatpush2.msra.mxu0 %v73
    %225 = vmatprep.subr.mxu0 0.0
    %226 = vmatpush2.msra.mxu0 %v72
    %227 = vmatprep.subr.mxu0 0.0
    %228 = vmatpush2.msra.mxu0 %v71
    %229 = vmatprep.subr.mxu0 0.0
    %230 = vmatpush2.msra.mxu0 %v70
    %231 = vmatprep.subr.mxu0 0.0
    %232 = vmatpush2.msra.mxu0 %v69
    %233 = vmatprep.subr.mxu0 0.0
    %234 = vmatpush2.msra.mxu0 %v68
    %235 = vmatprep.subr.mxu0 0.0
    %236 = vmatpush2.msra.mxu0 %v67
    %237 = vmatprep.subr.mxu0 0.0
    %238 = vmatpush2.msra.mxu0 %v66
    %239 = vmatprep.subr.mxu0 0.0
    %240 = vmatpush2.msra.mxu0 %v65
    %241 = vmatprep.subr.mxu0 0.0
    %242 = vmatpush2.msra.mxu0 %v64
    %243 = vmatprep.mubr.f32.mxu0 %v104
    %244 = vmatmul.mubr.f32.gmra.mxu0 %v102
    %v245 = vpop.f32.mrf.mxu0
    %v246 = vadd.f32 %v176, %v245
    %v247 = vpop.f32.mrf.mxu0
    %248 = vdwg.mxu0
    %vm249 = vcmask 33792
    %250 = vst.msk [vmem:[#allocation2] sm:$0x3] %vm249, %v246
    // Predicated region
    $region14: #{tpu_custom_call.1} parent=1 // pred_check
      _
    $region15: #{tpu_custom_call.1} parent=1 // pred_check_branch
      %252 = sbr.rel (0) target = $region17
    $region16: #{tpu_custom_call.1} parent=1 // pred_region
      %s254 = ssub.s32 32, 32
      %255 = vsyncadd [#allocation3], %s254
      %s257 = sshll.u32 [#allocation2], 4
      %s258 = int_to_ptr.vmem [resolvable:$true] %s257
      %260 = dma.vmem_to_hbm [thread:$0]  %s258, 32, %s3, [#allocation3]
    $region17: #{tpu_custom_call.1} parent=1 // pred_fallthru
      _
    // Predicated region
    $region18: #{tpu_custom_call.1} parent=1 // pred_check
      _
    $region19: #{tpu_custom_call.1} parent=1 // pred_check_branch
      %262 = sbr.rel (0) target = $region21
    $region20: #{tpu_custom_call.1} parent=1 // pred_region
      %263 = dma.done [#allocation3], 32
    $region21: #{tpu_custom_call.1} parent=1 // pred_fallthru
      _
    %264 = vsyncpa [#allocation3], 1

</llo_original>
